<compile_context>
chip_gen: v7x
topology: tpu7x:2x2x1
jax: 0.10.0
libtpu: 0.0.40
codegen_flags: <defaults>
</compile_context>

<pallas_src>
import functools

import jax
import jax.numpy as jnp
from jax.experimental import pallas as pl
from jax.experimental.pallas import tpu as pltpu

_EPS = 1e-8


def _chip_config():
    """Returns (num_slots, target_block_bytes_per_input, base_vmem_limit_bytes)."""
    try:
        kind = jax.devices()[0].device_kind.lower()
    except Exception:
        kind = ""
    if "v7" in kind or "7x" in kind:
        # 2 TensorCores per chip, ~3.2 TB/s HBM per TC, 64 MiB physical VMEM per TC.
        return 2, 4 * 1024 * 1024, 32 * 1024 * 1024
    if "v6" in kind:
        # Single TC, ~1.4 TB/s, 128 MiB VMEM: bigger blocks are free.
        return 1, 4 * 1024 * 1024, 64 * 1024 * 1024
    if "v5p" in kind or "v4" in kind:
        # Megacore: 2 TCs behind one device; keep the 2-slot parallel split.
        return 2, 2 * 1024 * 1024, 32 * 1024 * 1024
    if "v5" in kind:
        # v5e: single TC, ~820 GB/s; default scoped VMEM is only 16 MiB -> raise it.
        return 1, 2 * 1024 * 1024, 32 * 1024 * 1024
    return 1, 2 * 1024 * 1024, 32 * 1024 * 1024


def _sublane_multiple(itemsize):
    # f32 -> 8, bf16 -> 16, int8/fp8 -> 32 (packed dtypes pack along sublanes).
    return max(8, 32 // max(1, itemsize))


def _choose_tile_b(B, D, itemsize, target_block_bytes, num_slots):
    """Largest sublane-multiple row tile whose (tile_b, D) block stays <= budget."""
    sub = _sublane_multiple(itemsize)
    rows_budget = max(sub, target_block_bytes // max(1, D * itemsize))
    tile_b = min(4096, rows_budget)
    # No point tiling beyond the (sublane-padded) per-slot share of the batch.
    rows_per_slot = pl.cdiv(B, num_slots)
    tile_b = min(tile_b, sub * pl.cdiv(rows_per_slot, sub))
    return max(sub, (tile_b // sub) * sub)


def _loss_kernel(r_ref, t_ref, o_ref, acc_ref, *, metric, total_rows, tile_b,
                 tiles_per_slot, num_slots):
    if num_slots > 1:
        c = pl.program_id(0)      # slot / core axis ("parallel")
        i = pl.program_id(1)      # reduction over row tiles ("arbitrary")
    else:
        c = 0
        i = pl.program_id(0)

    @pl.when(i == 0)
    def _():
        acc_ref[0, 0] = jnp.float32(0.0)

    r = r_ref[...].astype(jnp.float32)
    t = t_ref[...].astype(jnp.float32)

    if metric == "cosine":
        dot = jnp.sum(r * t, axis=1, keepdims=True)          # (tile_b, 1)
        nr2 = jnp.sum(r * r, axis=1, keepdims=True)
        nt2 = jnp.sum(t * t, axis=1, keepdims=True)
        # sqrt before multiply (PyTorch formulation): no f32 overflow of nr2*nt2.
        denom = jnp.maximum(jnp.sqrt(nr2) * jnp.sqrt(nt2), jnp.float32(_EPS))
        term = dot / denom                                    # cos; wrapper does 1 - mean
    else:  # "l2": per-row euclidean distance == diag(cdist(rec, tgt, p=2))
        diff = r - t
        term = jnp.sqrt(jnp.sum(diff * diff, axis=1, keepdims=True))

    # Unclamped tile index (the index_map clamps the DMA; masking uses the true index
    # so duplicated / overhanging tiles contribute exactly 0).
    tile_idx = c * tiles_per_slot + i
    row0 = tile_idx * tile_b
    is_full = (row0 + tile_b) <= total_rows

    @pl.when(is_full)
    def _():
        acc_ref[0, 0] += jnp.sum(term)

    @pl.when(jnp.logical_not(is_full))
    def _():
        local = jax.lax.broadcasted_iota(jnp.int32, term.shape, 0)
        valid = (row0 + local) < total_rows
        acc_ref[0, 0] += jnp.sum(jnp.where(valid, term, 0.0))

    # Write the per-slot partial sum once, in the epilogue of the reduction axis.
    @pl.when(i == tiles_per_slot - 1)
    def _():
        o_ref[...] = jnp.full(o_ref.shape, acc_ref[0, 0], dtype=jnp.float32)


def target_reconstruction(reconstructions, targets, metric="cosine", *,
                          tile_b_override=None):
    """Pallas equivalent of TargetReconstruction.forward. Returns a scalar."""
    assert reconstructions.shape == targets.shape
    assert reconstructions.ndim == 2
    if metric not in ("cosine", "l2"):
        raise NotImplementedError(metric)

    B, D = reconstructions.shape
    itemsize = jnp.dtype(reconstructions.dtype).itemsize
    num_slots, target_block_bytes, base_vmem = _chip_config()

    if tile_b_override is not None:
        sub = _sublane_multiple(itemsize)
        tile_b = max(sub, (int(tile_b_override) // sub) * sub)
    else:
        tile_b = _choose_tile_b(B, D, itemsize, target_block_bytes, num_slots)

    num_tiles = pl.cdiv(B, tile_b)
    tiles_per_slot = pl.cdiv(num_tiles, num_slots)
    max_tile = num_tiles - 1

    if num_slots > 1:
        grid = (num_slots, tiles_per_slot)

        def in_map(c, i):
            # Clamp so a slot's extra iterations never DMA a block fully past the array
            # end; the in-kernel row mask zeroes any duplicated / padded rows.
            return (jnp.minimum(c * tiles_per_slot + i, max_tile), 0)

        out_map = lambda c, i: (c, 0, 0)
        dims = ("parallel", "arbitrary")
    else:
        grid = (tiles_per_slot,)

        def in_map(i):
            return (jnp.minimum(i, max_tile), 0)

        out_map = lambda i: (0, 0, 0)
        dims = ("arbitrary",)

    block_bytes = tile_b * D * itemsize
    # 2 inputs x 2 pipeline buffers + outputs/scratch slack.
    vmem_limit = int(max(base_vmem, 4 * block_bytes + 4 * 1024 * 1024))

    kernel = functools.partial(
        _loss_kernel, metric=metric, total_rows=B, tile_b=tile_b,
        tiles_per_slot=tiles_per_slot, num_slots=num_slots)

    out = pl.pallas_call(
        kernel,
        out_shape=jax.ShapeDtypeStruct((num_slots, 8, 128), jnp.float32),
        grid_spec=pltpu.PrefetchScalarGridSpec(
            num_scalar_prefetch=0,
            grid=grid,
            in_specs=[
                pl.BlockSpec((tile_b, D), in_map),
                pl.BlockSpec((tile_b, D), in_map),
            ],
            out_specs=pl.BlockSpec((1, 8, 128), out_map),
            scratch_shapes=[pltpu.SMEM((1, 1), jnp.float32)],
        ),
        compiler_params=pltpu.CompilerParams(
            dimension_semantics=dims,
            vmem_limit_bytes=vmem_limit,
        ),
    )(reconstructions, targets)

    total = jnp.sum(out[:, 0, 0])
    if metric == "cosine":
        return 1.0 - total / jnp.float32(B)
    return total / jnp.float32(B)


def _reference(rec, tgt, metric="cosine"):
    rec = rec.astype(jnp.float32)
    tgt = tgt.astype(jnp.float32)
    if metric == "cosine":
        dot = jnp.sum(rec * tgt, axis=1)
        denom = jnp.maximum(
            jnp.linalg.norm(rec, axis=1) * jnp.linalg.norm(tgt, axis=1), _EPS)
        return jnp.mean(1.0 - dot / denom)
    return jnp.mean(jnp.sqrt(jnp.sum((rec - tgt) ** 2, axis=1)))


if __name__ == "__main__":
    key = jax.random.PRNGKey(0)
    k1, k2, k3, k4 = jax.random.split(key, 4)

    # Aligned small shapes (dim=1 / D is the cosine-reduction axis).
    B, D = 16, 128
    rec = jax.random.normal(k1, (B, D), dtype=jnp.float32)
    tgt = jax.random.normal(k2, (B, D), dtype=jnp.float32)

    loss_cos = jax.block_until_ready(target_reconstruction(rec, tgt, metric="cosine"))
    loss_l2 = jax.block_until_ready(target_reconstruction(rec, tgt, metric="l2"))
    assert jnp.allclose(loss_cos, _reference(rec, tgt, "cosine"), atol=1e-5, rtol=1e-5)
    assert jnp.allclose(loss_l2, _reference(rec, tgt, "l2"), atol=1e-5, rtol=1e-5)

    # Ragged batch + non-128 feature dim exercises tail masking / partial blocks.
    B2, D2 = 13, 96
    rec2 = jax.random.normal(k3, (B2, D2), dtype=jnp.float32)
    tgt2 = jax.random.normal(k4, (B2, D2), dtype=jnp.float32)
    for m in ("cosine", "l2"):
        got = jax.block_until_ready(target_reconstruction(rec2, tgt2, metric=m))
        assert jnp.allclose(got, _reference(rec2, tgt2, m), atol=1e-5, rtol=1e-5)

    # Tiny forced tile exercises the multi-step reduction, accumulator reset, epilogue
    # and tail-mask gating even at small test shapes.
    B3, D3 = 29, 128
    rec3 = jax.random.normal(k1, (B3, D3), dtype=jnp.float32)
    tgt3 = jax.random.normal(k2, (B3, D3), dtype=jnp.float32)
    for m in ("cosine", "l2"):
        got = jax.block_until_ready(
            target_reconstruction(rec3, tgt3, metric=m, tile_b_override=8))
        assert jnp.allclose(got, _reference(rec3, tgt3, m), atol=1e-5, rtol=1e-5)

    print("KERNEL_OK")
</pallas_src>

<mosaic_0001>
module attributes {stable_mosaic.version = 11 : i64} {
  func.func @_loss_kernel(%arg0: i32, %arg1: memref<16x128xf32, #tpu.memory_space<vmem>>, %arg2: memref<16x128xf32, #tpu.memory_space<vmem>>, %arg3: memref<1x8x128xf32, #tpu.memory_space<vmem>>, %arg4: memref<1x1xf32, #tpu.memory_space<smem>>) attributes {dimension_semantics = [#tpu.dimension_semantics<arbitrary>], iteration_bounds = array<i64: 1>, scalar_prefetch = 0 : i64, scratch_operands = 1 : i64, tpu.core_type = #tpu.core_type<tc>, window_params = [{transform_indices = @transform_0, window_bounds = array<i64: 16, 128>}, {transform_indices = @transform_1, window_bounds = array<i64: 16, 128>}, {pipeline_mode = #tpu.pipeline_mode<synchronous>, transform_indices = @transform_2, window_bounds = array<i64: 1, 8, 128>}]} {
    %c0_i32 = arith.constant 0 : i32
    %0 = arith.cmpi eq, %arg0, %c0_i32 : i32
    %1 = arith.extui %0 : i1 to i32
    %c0_i32_0 = arith.constant 0 : i32
    %2 = arith.cmpi ne, %1, %c0_i32_0 : i32
    scf.if %2 {
      %cst_14 = arith.constant 0.000000e+00 : f32
      %c0_15 = arith.constant 0 : index
      %c0_16 = arith.constant 0 : index
      %32 = memref.load %arg4[%c0_15, %c0_16] : memref<1x1xf32, #tpu.memory_space<smem>>
      memref.store %cst_14, %arg4[%c0_15, %c0_16] : memref<1x1xf32, #tpu.memory_space<smem>>
    } else {
    }
    %c0 = arith.constant 0 : index
    %c0_1 = arith.constant 0 : index
    %3 = vector.load %arg1[%c0, %c0_1] : memref<16x128xf32, #tpu.memory_space<vmem>>, vector<16x128xf32>
    %c0_2 = arith.constant 0 : index
    %c0_3 = arith.constant 0 : index
    %4 = vector.load %arg2[%c0_2, %c0_3] : memref<16x128xf32, #tpu.memory_space<vmem>>, vector<16x128xf32>
    %5 = arith.mulf %3, %4 : vector<16x128xf32>
    %cst = arith.constant dense<0.000000e+00> : vector<16xf32>
    %6 = vector.multi_reduction <add>, %5, %cst [1] : vector<16x128xf32> to vector<16xf32>
    %7 = vector.shape_cast %6 : vector<16xf32> to vector<16x1xf32>
    %8 = arith.mulf %3, %3 : vector<16x128xf32>
    %cst_4 = arith.constant dense<0.000000e+00> : vector<16xf32>
    %9 = vector.multi_reduction <add>, %8, %cst_4 [1] : vector<16x128xf32> to vector<16xf32>
    %10 = vector.shape_cast %9 : vector<16xf32> to vector<16x1xf32>
    %11 = arith.mulf %4, %4 : vector<16x128xf32>
    %cst_5 = arith.constant dense<0.000000e+00> : vector<16xf32>
    %12 = vector.multi_reduction <add>, %11, %cst_5 [1] : vector<16x128xf32> to vector<16xf32>
    %13 = vector.shape_cast %12 : vector<16xf32> to vector<16x1xf32>
    %14 = math.sqrt %10 : vector<16x1xf32>
    %15 = math.sqrt %13 : vector<16x1xf32>
    %16 = arith.mulf %14, %15 : vector<16x1xf32>
    %cst_6 = arith.constant 9.99999993E-9 : f32
    %17 = vector.broadcast %cst_6 : f32 to vector<16x1xf32>
    %18 = arith.maximumf %16, %17 : vector<16x1xf32>
    %19 = arith.divf %7, %18 : vector<16x1xf32>
    %c0_i32_7 = arith.constant 0 : i32
    %20 = arith.addi %c0_i32_7, %arg0 : i32
    %c16_i32 = arith.constant 16 : i32
    %21 = arith.muli %20, %c16_i32 : i32
    %c16_i32_8 = arith.constant 16 : i32
    %22 = arith.addi %21, %c16_i32_8 : i32
    %c16_i32_9 = arith.constant 16 : i32
    %23 = arith.cmpi sle, %22, %c16_i32_9 : i32
    %24 = arith.extui %23 : i1 to i32
    %c0_i32_10 = arith.constant 0 : i32
    %25 = arith.cmpi ne, %24, %c0_i32_10 : i32
    scf.if %25 {
      %c0_14 = arith.constant 0 : index
      %c0_15 = arith.constant 0 : index
      %32 = memref.load %arg4[%c0_14, %c0_15] : memref<1x1xf32, #tpu.memory_space<smem>>
      %33 = vector.shape_cast %19 : vector<16x1xf32> to vector<1x16x1xf32>
      %cst_16 = arith.constant dense<0.000000e+00> : vector<1xf32>
      %34 = vector.multi_reduction <add>, %33, %cst_16 [1, 2] : vector<1x16x1xf32> to vector<1xf32>
      %35 = vector.shape_cast %34 : vector<1xf32> to vector<1x1x1xf32>
      %36 = vector.extract %35[0, 0, 0] : f32 from vector<1x1x1xf32>
      %37 = arith.addf %32, %36 : f32
      %c0_17 = arith.constant 0 : index
      %c0_18 = arith.constant 0 : index
      %38 = memref.load %arg4[%c0_17, %c0_18] : memref<1x1xf32, #tpu.memory_space<smem>>
      memref.store %37, %arg4[%c0_17, %c0_18] : memref<1x1xf32, #tpu.memory_space<smem>>
    } else {
    }
    %true = arith.constant true
    %26 = arith.xori %23, %true : i1
    %27 = arith.extui %26 : i1 to i32
    %c0_i32_11 = arith.constant 0 : i32
    %28 = arith.cmpi ne, %27, %c0_i32_11 : i32
    scf.if %28 {
      %32 = tpu.iota {dimensions = array<i32: 0>} : vector<16x1xi32>
      %33 = vector.broadcast %21 : i32 to vector<16x1xi32>
      %34 = arith.addi %33, %32 : vector<16x1xi32>
      %c16_i32_14 = arith.constant 16 : i32
      %35 = vector.broadcast %c16_i32_14 : i32 to vector<16x1xi32>
      %36 = arith.cmpi slt, %34, %35 : vector<16x1xi32>
      %c0_15 = arith.constant 0 : index
      %c0_16 = arith.constant 0 : index
      %37 = memref.load %arg4[%c0_15, %c0_16] : memref<1x1xf32, #tpu.memory_space<smem>>
      %cst_17 = arith.constant 0.000000e+00 : f32
      %38 = vector.broadcast %cst_17 : f32 to vector<16x1xf32>
      %39 = arith.select %36, %19, %38 : vector<16x1xi1>, vector<16x1xf32>
      %40 = vector.shape_cast %39 : vector<16x1xf32> to vector<1x16x1xf32>
      %cst_18 = arith.constant dense<0.000000e+00> : vector<1xf32>
      %41 = vector.multi_reduction <add>, %40, %cst_18 [1, 2] : vector<1x16x1xf32> to vector<1xf32>
      %42 = vector.shape_cast %41 : vector<1xf32> to vector<1x1x1xf32>
      %43 = vector.extract %42[0, 0, 0] : f32 from vector<1x1x1xf32>
      %44 = arith.addf %37, %43 : f32
      %c0_19 = arith.constant 0 : index
      %c0_20 = arith.constant 0 : index
      %45 = memref.load %arg4[%c0_19, %c0_20] : memref<1x1xf32, #tpu.memory_space<smem>>
      memref.store %44, %arg4[%c0_19, %c0_20] : memref<1x1xf32, #tpu.memory_space<smem>>
    } else {
    }
    %c0_i32_12 = arith.constant 0 : i32
    %29 = arith.cmpi eq, %arg0, %c0_i32_12 : i32
    %30 = arith.extui %29 : i1 to i32
    %c0_i32_13 = arith.constant 0 : i32
    %31 = arith.cmpi ne, %30, %c0_i32_13 : i32
    scf.if %31 {
      %c0_14 = arith.constant 0 : index
      %c0_15 = arith.constant 0 : index
      %32 = memref.load %arg4[%c0_14, %c0_15] : memref<1x1xf32, #tpu.memory_space<smem>>
      %33 = vector.broadcast %32 : f32 to vector<1x8x128xf32>
      %c0_16 = arith.constant 0 : index
      %c0_17 = arith.constant 0 : index
      %c0_18 = arith.constant 0 : index
      %34 = vector.load %arg3[%c0_16, %c0_17, %c0_18] : memref<1x8x128xf32, #tpu.memory_space<vmem>>, vector<1x8x128xf32>
      tpu.vector_store %arg3[%c0_16, %c0_17, %c0_18], %33 {strides = array<i32>} : memref<1x8x128xf32, #tpu.memory_space<vmem>>, vector<1x8x128xf32>,
    } else {
    }
    return
  }
  func.func @transform_0(%arg0: i32) -> (i32, i32) {
    %c0_i32 = arith.constant 0 : i32
    %0 = arith.minsi %arg0, %c0_i32 : i32
    %c0_i32_0 = arith.constant 0 : i32
    %c0_i32_1 = arith.constant 0 : i32
    return %0, %c0_i32_0 : i32, i32
  }
  func.func @transform_1(%arg0: i32) -> (i32, i32) {
    %c0_i32 = arith.constant 0 : i32
    %0 = arith.minsi %arg0, %c0_i32 : i32
    %c0_i32_0 = arith.constant 0 : i32
    %c0_i32_1 = arith.constant 0 : i32
    return %0, %c0_i32_0 : i32, i32
  }
  func.func @transform_2(%arg0: i32) -> (i32, i32, i32) {
    %c0_i32 = arith.constant 0 : i32
    %c0_i32_0 = arith.constant 0 : i32
    %c0_i32_1 = arith.constant 0 : i32
    %c0_i32_2 = arith.constant 0 : i32
    return %c0_i32, %c0_i32_0, %c0_i32_1 : i32, i32, i32
  }
}

</mosaic_0001>

<llo_original>
// kernel: tpu_custom_call.1
$region0: #{tpu_custom_call.1}
  #allocation0 [shape = 'u32[]', space=smem, size = 0x4, offset = 0x4, fixed_abs, tag = 'smem constant byte address 0x4 - core index']
  #allocation1 [shape = 'u32[144,128]{1,0:T(1,128)}', space=vmem, size = 0x12000, scoped, tag = 'internal scratch']
  #allocation2 [shape = 'f32[1,1]{1,0:T(1,128)}', space=smem, size = 0x200, scoped, tag = 'scratch operand']
  %s0 = inlined_call_operand.hbm [shape: f32[16,128], index: 0, kind: input, shape index: {}]
  %s1 = inlined_call_operand.hbm [shape: f32[16,128], index: 1, kind: input, shape index: {}]
  %s2 = inlined_call_operand.hbm [shape: f32[1,8,128], index: 2, kind: output, shape index: {}]
  %s3 = sld [smem:[#allocation0]]
  $region42: #{tpu_custom_call.1} parent=0
    _
  %s5 = ssub.s32 1, %s3
  %s6 = scalar_select 0, %s5, %s3
  $region1: #{tpu_custom_call.1} parent=0
    #allocation3 [shape = 'u8[8192]{0}', space=vmem, size = 0x2000, scoped, tag = 'input window, operand 0, single buffered']
    #allocation4 [shape = 's32[1]{0}', space=sflag, size = 0x4, scoped, tag = 'scoped memory for tpu_custom_call.1']
    #allocation5 [shape = 's32[1]{0}', space=sflag, size = 0x4, scoped, tag = 'scoped memory for tpu_custom_call.1']
    #allocation6 [shape = 'u8[8192]{0}', space=vmem, size = 0x2000, scoped, tag = 'input window, operand 1, single buffered']
    #allocation7 [shape = 's32[1]{0}', space=sflag, size = 0x4, scoped, tag = 'scoped memory for tpu_custom_call.1']
    #allocation8 [shape = 'u8[4096]{0}', space=vmem, size = 0x1000, scoped, tag = 'output window, operand 0, single buffered']
    %7 = vsyncpa [#allocation4], 0
    %8 = vsyncpa [#allocation7], 0
    %9 = vsyncpa [#allocation5], 0
    // Predicated region
    $region2: #{tpu_custom_call.1} parent=1 // pred_check
      _
    $region3: #{tpu_custom_call.1} parent=1 // pred_check_branch
      %11 = sbr.rel (0) target = $region5
    $region4: #{tpu_custom_call.1} parent=1 // pred_region
      %s13 = ssub.s32 256, 256
      %14 = vsyncadd [#allocation4], %s13
      %s15 = sshll.u32 [#allocation3], 4
      %s16 = int_to_ptr.vmem [resolvable:$true] %s15
      %21 = dma.hbm_to_vmem [thread:$0]  %s0, 256, %s16, [#allocation4], 128, 128, 8
    $region5: #{tpu_custom_call.1} parent=1 // pred_fallthru
      _
    // Predicated region
    $region6: #{tpu_custom_call.1} parent=1 // pred_check
      _
    $region7: #{tpu_custom_call.1} parent=1 // pred_check_branch
      %23 = sbr.rel (0) target = $region9
    $region8: #{tpu_custom_call.1} parent=1 // pred_region
      %s25 = ssub.s32 256, 256
      %26 = vsyncadd [#allocation7], %s25
      %s27 = sshll.u32 [#allocation6], 4
      %s28 = int_to_ptr.vmem [resolvable:$true] %s27
      %33 = dma.hbm_to_vmem [thread:$0]  %s1, 256, %s28, [#allocation7], 128, 128, 8
    $region9: #{tpu_custom_call.1} parent=1 // pred_fallthru
      _
    // Predicated region
    $region10: #{tpu_custom_call.1} parent=1 // pred_check
      _
    $region11: #{tpu_custom_call.1} parent=1 // pred_check_branch
      %35 = sbr.rel (0) target = $region13
    $region12: #{tpu_custom_call.1} parent=1 // pred_region
      %36 = dma.done [#allocation4], 256
    $region13: #{tpu_custom_call.1} parent=1 // pred_fallthru
      _
    // Predicated region
    $region14: #{tpu_custom_call.1} parent=1 // pred_check
      _
    $region15: #{tpu_custom_call.1} parent=1 // pred_check_branch
      %38 = sbr.rel (0) target = $region17
    $region16: #{tpu_custom_call.1} parent=1 // pred_region
      %39 = dma.done [#allocation7], 256
    $region17: #{tpu_custom_call.1} parent=1 // pred_fallthru
      _
    %p40 = scmp.eq.s32.totalorder 0, 0
    // Predicated region
    $region18: #{tpu_custom_call.1} parent=1 // pred_check
      %p41 = pneg %p40
    $region19: #{tpu_custom_call.1} parent=1 // pred_check_branch
      %43 = sbr.rel (%p41) target = $region21
    $region20: #{tpu_custom_call.1} parent=1 // pred_region
      %s44 = scalar_lea.smem [#allocation2], 0
      %45 = sst [smem:[%s44]] 0.0
    $region21: #{tpu_custom_call.1} parent=1 // pred_fallthru
      _
    %v46 = vld [vmem:[#allocation3] sm:$0xff]
    %v47 = vld [vmem:[#allocation3 + $0x8] sm:$0xff]
    %v48 = vld [vmem:[#allocation6] sm:$0xff]
    %v49 = vld [vmem:[#allocation6 + $0x8] sm:$0xff]
    %v50 = vmul.f32 %v46, %v48
    %v51 = vmul.f32 %v47, %v49
    %52 = vadd.xlane.f32.xlu0 %v50
    %v53 = vpop.xlane.xlu0 %52
    %54 = vadd.xlane.f32.xlu0 %v51
    %v55 = vpop.xlane.xlu0 %54
    %v56 = vmul.f32 %v46, %v46
    %v57 = vmul.f32 %v47, %v47
    %58 = vadd.xlane.f32.xlu0 %v56
    %v59 = vpop.xlane.xlu0 %58
    %60 = vadd.xlane.f32.xlu0 %v57
    %v61 = vpop.xlane.xlu0 %60
    %v62 = vmul.f32 %v48, %v48
    %v63 = vmul.f32 %v49, %v49
    %64 = vadd.xlane.f32.xlu0 %v62
    %v65 = vpop.xlane.xlu0 %64
    %66 = vadd.xlane.f32.xlu0 %v63
    %v67 = vpop.xlane.xlu0 %66
    %v68 = vrsqrt.pop %v59
    %v69 = vmul.f32 %v59, %v68
    %vm70 = vcmp.eq.f32.partialorder %v59, inf
    %v71 = vsel %vm70, %v59, %v69
    %vm72 = vcmp.eq.f32.partialorder %v59, 0.0
    %v73 = vand.u32 %v59, 2147483648
    %v74 = vsel %vm72, %v73, %v71
    %v75 = vrsqrt.pop %v61
    %v76 = vmul.f32 %v61, %v75
    %vm77 = vcmp.eq.f32.partialorder %v61, inf
    %v78 = vsel %vm77, %v61, %v76
    %vm79 = vcmp.eq.f32.partialorder %v61, 0.0
    %v80 = vand.u32 %v61, 2147483648
    %v81 = vsel %vm79, %v80, %v78
    %v82 = vrsqrt.pop %v65
    %v83 = vmul.f32 %v65, %v82
    %vm84 = vcmp.eq.f32.partialorder %v65, inf
    %v85 = vsel %vm84, %v65, %v83
    %vm86 = vcmp.eq.f32.partialorder %v65, 0.0
    %v87 = vand.u32 %v65, 2147483648
    %v88 = vsel %vm86, %v87, %v85
    %v89 = vrsqrt.pop %v67
    %v90 = vmul.f32 %v67, %v89
    %vm91 = vcmp.eq.f32.partialorder %v67, inf
    %v92 = vsel %vm91, %v67, %v90
    %vm93 = vcmp.eq.f32.partialorder %v67, 0.0
    %v94 = vand.u32 %v67, 2147483648
    %v95 = vsel %vm93, %v94, %v92
    %v96 = vmul.f32 %v74, %v88
    %v97 = vmul.f32 %v81, %v95
    %v98 = vmax.f32 %v96, 1e-08
    %v99 = vmax.f32 %v97, 1e-08
    %v100 = vrcp.pop %v98
    %v101 = vmul.f32 %v53, %v100
    %v102 = vrcp.pop %v99
    %v103 = vmul.f32 %v55, %v102
    %s104 = smul.u32 0, 16
    %s105 = sadd.s32 %s104, 16
    %p106 = scmp.le.s32.totalorder %s105, 16
    // Predicated region
    $region22: #{tpu_custom_call.1} parent=1 // pred_check
      %p107 = pneg %p106
    $region23: #{tpu_custom_call.1} parent=1 // pred_check_branch
      %109 = sbr.rel (%p107) target = $region25
    $region24: #{tpu_custom_call.1} parent=1 // pred_region
      %s110 = sld [smem:[#allocation2]]
      %vm111 = vcmask 7168
      %v112 = vsel %vm111, %v101, 0.0
      %v113 = vsel %vm111, %v103, 0.0
      %v114 = vadd.f32 %v112, %v113
      %115 = vadd.xlane.f32.xlu0 %v114
      %v116 = vpop.xlane.xlu0 %115
      %v117 = vrot.slane %v116, 4
      %v118 = vadd.f32 %v116, %v117
      %v119 = vrot.slane %v118, 2
      %v120 = vadd.f32 %v118, %v119
      %v121 = vrot.slane %v120, 1
      %v122 = vadd.f32 %v120, %v121
      %s123 = vtos %v122
      %s124 = sadd.f32 %s110, %s123
      %s125 = scalar_lea.smem [#allocation2], 0
      %126 = sst [smem:[%s125]] %s124
    $region25: #{tpu_custom_call.1} parent=1 // pred_fallthru
      _
    %p127 = scmp.gt.s32.totalorder %s105, 16
    // Predicated region
    $region26: #{tpu_custom_call.1} parent=1 // pred_check
      %p128 = pneg %p127
    $region27: #{tpu_custom_call.1} parent=1 // pred_check_branch
      %130 = sbr.rel (%p128) target = $region29
    $region28: #{tpu_custom_call.1} parent=1 // pred_region
      %v131 = vlaneseq
      %v132 = vshrl.u32 %v131, 7
      %v133 = vadd.s32 %v132, 8
      %v134 = vstv %s104
      %v135 = vadd.s32 %v134, %v132
      %v136 = vadd.s32 %v134, %v133
      %vm137 = vcmp.lt.s32.totalorder %v135, 16
      %vm138 = vcmp.lt.s32.totalorder %v136, 16
      %s139 = sld [smem:[#allocation2]]
      %v140 = vsel %vm137, %v101, 0.0
      %v141 = vsel %vm138, %v103, 0.0
      %vm142 = vcmask 7168
      %v143 = vsel %vm142, %v140, 0.0
      %v144 = vsel %vm142, %v141, 0.0
      %v145 = vadd.f32 %v143, %v144
      %146 = vadd.xlane.f32.xlu0 %v145
      %v147 = vpop.xlane.xlu0 %146
      %v148 = vrot.slane %v147, 4
      %v149 = vadd.f32 %v147, %v148
      %v150 = vrot.slane %v149, 2
      %v151 = vadd.f32 %v149, %v150
      %v152 = vrot.slane %v151, 1
      %v153 = vadd.f32 %v151, %v152
      %s154 = vtos %v153
      %s155 = sadd.f32 %s139, %s154
      %s156 = scalar_lea.smem [#allocation2], 0
      %157 = sst [smem:[%s156]] %s155
    $region29: #{tpu_custom_call.1} parent=1 // pred_fallthru
      _
    // Predicated region
    $region30: #{tpu_custom_call.1} parent=1 // pred_check
      %p158 = pneg %p40
    $region31: #{tpu_custom_call.1} parent=1 // pred_check_branch
      %160 = sbr.rel (%p158) target = $region33
    $region32: #{tpu_custom_call.1} parent=1 // pred_region
      %s161 = sld [smem:[#allocation2]]
      %v162 = vstv %s161
      %163 = vst [vmem:[#allocation8] sm:$0xff] %v162
    $region33: #{tpu_custom_call.1} parent=1 // pred_fallthru
      _
    // Predicated region
    $region34: #{tpu_custom_call.1} parent=1 // pred_check
      _
    $region35: #{tpu_custom_call.1} parent=1 // pred_check_branch
      %165 = sbr.rel (0) target = $region37
    $region36: #{tpu_custom_call.1} parent=1 // pred_region
      %s167 = ssub.s32 128, 128
      %168 = vsyncadd [#allocation5], %s167
      %s170 = sshll.u32 [#allocation8], 4
      %s171 = int_to_ptr.vmem [resolvable:$true] %s170
      %173 = dma.vmem_to_hbm [thread:$0]  %s171, 128, %s2, [#allocation5]
    $region37: #{tpu_custom_call.1} parent=1 // pred_fallthru
      _
    // Predicated region
    $region38: #{tpu_custom_call.1} parent=1 // pred_check
      _
    $region39: #{tpu_custom_call.1} parent=1 // pred_check_branch
      %175 = sbr.rel (0) target = $region41
    $region40: #{tpu_custom_call.1} parent=1 // pred_region
      %176 = dma.done [#allocation5], 128
    $region41: #{tpu_custom_call.1} parent=1 // pred_fallthru
      _
    %177 = vsyncpa [#allocation4], 1
    %178 = vsyncpa [#allocation7], 1
    %179 = vsyncpa [#allocation5], 1

</llo_original>
